<compile_context>
chip_gen: v6e
topology: v6e:2x2x1
jax: 0.10.0
libtpu: 0.0.40
codegen_flags: <defaults>
</compile_context>

<pallas_src>
import functools
import math

import jax
import jax.numpy as jnp
from jax.experimental import pallas as pl
from jax.experimental.pallas import tpu as pltpu

_LANE = 128
_INV_SQRT2 = 1.0 / math.sqrt(2.0)
_DEFAULT_VMEM = 64 << 20          # conservative fallback = v7x per-TC VMEM


def _round_up(x, m):
    return ((x + m - 1) // m) * m


def _vmem_capacity_bytes():
    """Physical VMEM of the attached TPU generation (conservative fallback)."""
    try:
        return int(pltpu.get_tpu_info().vmem_capacity_bytes)
    except Exception:
        return _DEFAULT_VMEM


def _block_spec(shape, index_map, *, single_buffer=False):
    """BlockSpec; grid-invariant operands request a single VMEM buffer."""
    if single_buffer and hasattr(pl, "Buffered"):
        try:
            return pl.BlockSpec(shape, index_map, pipeline_mode=pl.Buffered(1))
        except TypeError:   # older JAX without pipeline_mode -> default buffering
            pass
    return pl.BlockSpec(shape, index_map)


# --------------------------------------------------------------------------- #
# Kernel
# --------------------------------------------------------------------------- #
def _mlp_kernel(x_ref, w1_ref, b1_ref, w2_ref, b2_ref, o_ref, acc_ref,
                *, approximate):
    # Grid: (token tiles, hidden tiles).  The hidden axis is the fc2 reduction,
    # so the output block is revisited across it -> f32 accumulator scratch.
    k = pl.program_id(1)

    @pl.when(k == 0)
    def _():
        acc_ref[...] = jnp.zeros_like(acc_ref)

    # fc1 partial: (tm, Cin) @ (Cin, th) on the MXU, f32 accumulation.
    h = jnp.dot(x_ref[...], w1_ref[...], preferred_element_type=jnp.float32)
    h = h + b1_ref[...]                       # bias already f32 (wrapper-cast)

    if approximate:
        # tanh GELU in the weight dtype: exp/tanh go to the EUP slot and bf16
        # element-wise work halves vreg traffic on v6e/v7x.
        h = jax.nn.gelu(h.astype(w2_ref.dtype), approximate=True)
    else:
        # exact erf GELU in f32 (torch.nn.GELU default parity).
        h = 0.5 * h * (1.0 + jax.lax.erf(h * _INV_SQRT2))
        h = h.astype(w2_ref.dtype)

    # dropout(p=0.0) is the identity.
    # TODO(synk): dropout p>0 would need pltpu.prng_seed/prng_random_bits masks.

    # fc2 partial over this hidden chunk, accumulated in f32.
    acc_ref[...] += jnp.dot(h, w2_ref[...], preferred_element_type=jnp.float32)

    @pl.when(k == pl.num_programs(1) - 1)
    def _():
        o_ref[...] = (acc_ref[...] + b2_ref[...]).astype(o_ref.dtype)


# --------------------------------------------------------------------------- #
# One-time parameter preparation (hoisted out of the per-call path)
# --------------------------------------------------------------------------- #
def prepare_mlp_params(w1, b1, w2, b2):
    """PyTorch layout in: w1 (hidden, in), b1 (hidden,), w2 (out, hidden), b2 (out,).

    Returns weights transposed to (in, out) and zero-padded so every feature
    dim is a multiple of 128 (lane-dense loads/stores), plus biases pre-cast
    to f32 rows.  Call once per parameter set; reuse on every forward."""
    hidden, cin = w1.shape
    cout = w2.shape[0]
    cin_p = _round_up(cin, _LANE)
    h_p = _round_up(hidden, _LANE)
    cout_p = _round_up(cout, _LANE)

    w1_t = jnp.pad(w1.T, ((0, cin_p - cin), (0, h_p - hidden)))
    w2_t = jnp.pad(w2.T, ((0, h_p - hidden), (0, cout_p - cout)))
    b1_r = jnp.pad(b1.astype(jnp.float32), (0, h_p - hidden)).reshape(1, h_p)
    b2_r = jnp.pad(b2.astype(jnp.float32), (0, cout_p - cout)).reshape(1, cout_p)

    dims = (cin, hidden, cout)
    return (w1_t, b1_r, w2_t, b2_r), dims


# --------------------------------------------------------------------------- #
# Forward
# --------------------------------------------------------------------------- #
def mlp_forward(x, params, dims, *, tm=None, th=None, approximate=False,
                interpret=False):
    """x: (..., in_features); (params, dims) from prepare_mlp_params."""
    w1_t, b1_r, w2_t, b2_r = params
    cin, _hidden, cout = dims
    cin_p, h_p = w1_t.shape
    cout_p = w2_t.shape[1]

    lead_shape = x.shape[:-1]
    x2d = x.reshape(-1, cin)
    n = x2d.shape[0]

    act_itemsize = jnp.dtype(x.dtype).itemsize
    w_itemsize = jnp.dtype(w1_t.dtype).itemsize
    sub = max(8, 32 // act_itemsize)          # sublane packing multiple

    # Pad only the contracted feature axis, and only when not lane-aligned
    # (padded weight rows are zero -> exact).  Token axis is never padded:
    # Pallas partial last tiles are row-local, so OOB rows are simply dropped.
    if cin_p != cin:
        x2d = jnp.pad(x2d, ((0, 0), (0, cin_p - cin)))

    # ---- generation-aware planning ----------------------------------------
    cap = _vmem_capacity_bytes()
    budget = int(cap * 0.7)                   # headroom for Mosaic scratch

    if tm is None:
        tm = 512 if cap >= (100 << 20) else 256   # 128-MiB chips vs v7x 64 MiB
    tm = max(sub, (int(tm) // sub) * sub)
    tm = min(tm, _round_up(n, sub))
    # Keep several token-grid steps so megacore (v7x: 2 TCs) has work.
    min_steps = 4 if cap < (100 << 20) else 2
    if n >= min_steps * sub:
        tm = min(tm, _round_up(-(-n // min_steps), sub))

    def _vmem_need(tm_, th_, w_bufs):
        return (2 * tm_ * cin_p * act_itemsize            # x tiles (dbl buffer)
                + 2 * tm_ * cout_p * act_itemsize         # out tiles
                + w_bufs * (cin_p * th_ + th_ * cout_p) * w_itemsize
                + w_bufs * th_ * 4 + 2 * cout_p * 4       # f32 bias rows
                + tm_ * cout_p * 4                        # f32 accumulator
                + 2 * tm_ * th_ * 4)                      # f32 element-wise temps

    # Hidden ("K") tiling: prefer whole-H resident (single-buffered, grid
    # invariant); otherwise largest divisor tile that fits double-buffered.
    if th is None:
        m = h_p // _LANE
        cands = sorted({_LANE * d for d in range(1, m + 1) if m % d == 0},
                       reverse=True)
        th = _LANE
        for cand in cands:
            if _vmem_need(tm, cand, 1 if cand == h_p else 2) <= budget:
                th = cand
                break
    else:
        th = min(_round_up(int(th), _LANE), h_p)
        if h_p % th:
            raise ValueError("th must evenly divide the padded hidden size")
    while tm > sub and _vmem_need(tm, th, 1 if th == h_p else 2) > budget:
        tm = max(sub, ((tm // 2) // sub) * sub)

    k_tiles = h_p // th
    n_tiles = -(-n // tm)
    grid = (n_tiles, k_tiles)
    weights_invariant = (k_tiles == 1)

    in_specs = [
        pl.BlockSpec((tm, cin_p), lambda i, k: (i, 0)),
        _block_spec((cin_p, th), lambda i, k: (0, k),
                    single_buffer=weights_invariant),
        _block_spec((1, th), lambda i, k: (0, k),
                    single_buffer=weights_invariant),
        _block_spec((th, cout_p), lambda i, k: (k, 0),
                    single_buffer=weights_invariant),
        _block_spec((1, cout_p), lambda i, k: (0, 0), single_buffer=True),
    ]
    out_spec = pl.BlockSpec((tm, cout_p), lambda i, k: (i, 0))

    flops = 2 * n * (cin_p * h_p + h_p * cout_p)
    bytes_accessed = (n * cin_p * act_itemsize + n * cout_p * act_itemsize
                      + (cin_p * h_p + h_p * cout_p) * w_itemsize
                      + (h_p + cout_p) * 4)
    cost = pl.CostEstimate(flops=flops, transcendentals=n * h_p,
                           bytes_accessed=bytes_accessed)

    kernel = functools.partial(_mlp_kernel, approximate=approximate)
    out2d = pl.pallas_call(
        kernel,
        out_shape=jax.ShapeDtypeStruct((n, cout_p), x.dtype),
        grid_spec=pltpu.PrefetchScalarGridSpec(
            num_scalar_prefetch=0,
            grid=grid,
            in_specs=in_specs,
            out_specs=out_spec,
            scratch_shapes=[pltpu.VMEM((tm, cout_p), jnp.float32)],
        ),
        compiler_params=pltpu.CompilerParams(
            dimension_semantics=("parallel", "arbitrary"),
            vmem_limit_bytes=int(cap * 0.9)),
        cost_estimate=cost,
        interpret=interpret,
    )(x2d, w1_t, b1_r, w2_t, b2_r)

    if cout_p != cout:
        out2d = out2d[:, :cout]
    return out2d.reshape(*lead_shape, cout)


# --------------------------------------------------------------------------- #
# Reference / test utilities
# --------------------------------------------------------------------------- #
def init_mlp_params(key, in_features, hidden_features, out_features,
                    dtype=jnp.float32):
    """Deterministic synthetic params matching nn.Linear shapes."""
    k1, k2, k3, k4 = jax.random.split(key, 4)
    bound1 = 1.0 / math.sqrt(in_features)
    bound2 = 1.0 / math.sqrt(hidden_features)
    w1 = jax.random.uniform(k1, (hidden_features, in_features), dtype, -bound1, bound1)
    b1 = jax.random.uniform(k2, (hidden_features,), dtype, -bound1, bound1)
    w2 = jax.random.uniform(k3, (out_features, hidden_features), dtype, -bound2, bound2)
    b2 = jax.random.uniform(k4, (out_features,), dtype, -bound2, bound2)
    return w1, b1, w2, b2


def _ref_mlp(x, w1, b1, w2, b2):
    hp = jax.lax.Precision.HIGHEST
    h = jnp.dot(x, w1.T, precision=hp) + b1
    h = 0.5 * h * (1.0 + jax.lax.erf(h * _INV_SQRT2))
    return jnp.dot(h, w2.T, precision=hp) + b2


if __name__ == "__main__":
    # Mlp(in_features=4, hidden_features=32) applied to x of shape (B, L, C)
    B, L, C_in = 2, 8, 4
    hidden = 32
    C_out = C_in  # out_features defaults to in_features

    key = jax.random.PRNGKey(0)
    kx, kp = jax.random.split(key)
    x = jax.random.normal(kx, (B, L, C_in), jnp.float32)
    w1, b1, w2, b2 = init_mlp_params(kp, C_in, hidden, C_out)

    # One-time parameter prep (transpose + pad hoisted out of the hot path).
    params, dims = prepare_mlp_params(w1, b1, w2, b2)

    # 1) f32, exact erf GELU: parity with the PyTorch module.
    y = mlp_forward(x, params, dims, approximate=False)
    jax.block_until_ready(y)
    y_ref = _ref_mlp(x, w1, b1, w2, b2)
    assert y.shape == (B, L, C_out)
    assert jnp.allclose(y, y_ref, atol=1e-4, rtol=1e-4)

    # 2) forced hidden ("K") tiling path (accumulator across k), still exact.
    w1b, b1b, w2b, b2b = init_mlp_params(kp, C_in, 256, C_out)
    params_big, dims_big = prepare_mlp_params(w1b, b1b, w2b, b2b)
    y_big = mlp_forward(x, params_big, dims_big, th=128, approximate=False)
    jax.block_until_ready(y_big)
    y_big_ref = _ref_mlp(x, w1b, b1b, w2b, b2b)
    assert jnp.allclose(y_big, y_big_ref, atol=1e-4, rtol=1e-4)

    # 3) bf16 production mode: tanh-approx GELU + bf16 element-wise work.
    xb = x.astype(jnp.bfloat16)
    wb = [p.astype(jnp.bfloat16) for p in (w1, b1, w2, b2)]
    params_bf, dims_bf = prepare_mlp_params(*wb)
    yb = mlp_forward(xb, params_bf, dims_bf, approximate=True)
    jax.block_until_ready(yb)
    yb_ref = _ref_mlp(xb.astype(jnp.float32), *[p.astype(jnp.float32) for p in wb])
    assert yb.shape == (B, L, C_out)
    assert bool(jnp.all(jnp.isfinite(yb.astype(jnp.float32))))
    assert jnp.allclose(yb.astype(jnp.float32), yb_ref, atol=1e-1, rtol=1e-1)

    print("KERNEL_OK")
</pallas_src>

<mosaic_0001>
module attributes {stable_mosaic.version = 11 : i64} {
  func.func @_mlp_kernel(%arg0: i32, %arg1: i32, %arg2: memref<16x128xf32, #tpu.memory_space<vmem>>, %arg3: memref<128x128xf32, #tpu.memory_space<vmem>>, %arg4: memref<1x128xf32, #tpu.memory_space<vmem>>, %arg5: memref<128x128xf32, #tpu.memory_space<vmem>>, %arg6: memref<1x128xf32, #tpu.memory_space<vmem>>, %arg7: memref<16x128xf32, #tpu.memory_space<vmem>>, %arg8: memref<16x128xf32, #tpu.memory_space<vmem>>) attributes {dimension_semantics = [#tpu.dimension_semantics<parallel>, #tpu.dimension_semantics<arbitrary>], iteration_bounds = array<i64: 1, 1>, scalar_prefetch = 0 : i64, scratch_operands = 1 : i64, tpu.core_type = #tpu.core_type<tc>, window_params = [{transform_indices = @transform_0, window_bounds = array<i64: 16, 128>}, {pipeline_mode = #tpu.pipeline_mode<synchronous>, transform_indices = @transform_1, window_bounds = array<i64: 128, 128>}, {pipeline_mode = #tpu.pipeline_mode<synchronous>, transform_indices = @transform_2, window_bounds = array<i64: 1, 128>}, {pipeline_mode = #tpu.pipeline_mode<synchronous>, transform_indices = @transform_3, window_bounds = array<i64: 128, 128>}, {pipeline_mode = #tpu.pipeline_mode<synchronous>, transform_indices = @transform_4, window_bounds = array<i64: 1, 128>}, {transform_indices = @transform_5, window_bounds = array<i64: 16, 128>}]} {
    %c0_i32 = arith.constant 0 : i32
    %0 = arith.cmpi eq, %arg1, %c0_i32 : i32
    %1 = arith.extui %0 : i1 to i32
    %c0_i32_0 = arith.constant 0 : i32
    %2 = arith.cmpi ne, %1, %c0_i32_0 : i32
    scf.if %2 {
      %cst_18 = arith.constant 0.000000e+00 : f32
      %25 = vector.broadcast %cst_18 : f32 to vector<16x128xf32>
      %c0_19 = arith.constant 0 : index
      %c0_20 = arith.constant 0 : index
      %26 = vector.load %arg8[%c0_19, %c0_20] : memref<16x128xf32, #tpu.memory_space<vmem>>, vector<16x128xf32>
      tpu.vector_store %arg8[%c0_19, %c0_20], %25 {strides = array<i32>} : memref<16x128xf32, #tpu.memory_space<vmem>>, vector<16x128xf32>,
    } else {
    }
    %c0 = arith.constant 0 : index
    %c0_1 = arith.constant 0 : index
    %3 = vector.load %arg2[%c0, %c0_1] : memref<16x128xf32, #tpu.memory_space<vmem>>, vector<16x128xf32>
    %c0_2 = arith.constant 0 : index
    %c0_3 = arith.constant 0 : index
    %4 = vector.load %arg3[%c0_2, %c0_3] : memref<128x128xf32, #tpu.memory_space<vmem>>, vector<128x128xf32>
    %cst = arith.constant dense<0.000000e+00> : vector<16x128xf32>
    %5 = tpu.matmul %3, %4, %cst {dimension_numbers = #tpu.dot_dimension_numbers<[1], [0], [0], [1], [0, 0, 1, 1], [], []>} : vector<16x128xf32>, vector<128x128xf32>, vector<16x128xf32> -> vector<16x128xf32>
    %c0_4 = arith.constant 0 : index
    %c0_5 = arith.constant 0 : index
    %6 = vector.load %arg4[%c0_4, %c0_5] : memref<1x128xf32, #tpu.memory_space<vmem>>, vector<1x128xf32>
    %7 = vector.broadcast %6 : vector<1x128xf32> to vector<16x128xf32>
    %8 = arith.addf %5, %7 : vector<16x128xf32>
    %cst_6 = arith.constant 5.000000e-01 : f32
    %9 = vector.broadcast %cst_6 : f32 to vector<16x128xf32>
    %10 = arith.mulf %9, %8 : vector<16x128xf32>
    %cst_7 = arith.constant 0.707106769 : f32
    %11 = vector.broadcast %cst_7 : f32 to vector<16x128xf32>
    %12 = arith.mulf %8, %11 : vector<16x128xf32>
    %13 = math.erf %12 : vector<16x128xf32>
    %cst_8 = arith.constant 1.000000e+00 : f32
    %14 = vector.broadcast %cst_8 : f32 to vector<16x128xf32>
    %15 = arith.addf %14, %13 : vector<16x128xf32>
    %16 = arith.mulf %10, %15 : vector<16x128xf32>
    %c0_9 = arith.constant 0 : index
    %c0_10 = arith.constant 0 : index
    %17 = vector.load %arg8[%c0_9, %c0_10] : memref<16x128xf32, #tpu.memory_space<vmem>>, vector<16x128xf32>
    %c0_11 = arith.constant 0 : index
    %c0_12 = arith.constant 0 : index
    %18 = vector.load %arg5[%c0_11, %c0_12] : memref<128x128xf32, #tpu.memory_space<vmem>>, vector<128x128xf32>
    %cst_13 = arith.constant dense<0.000000e+00> : vector<16x128xf32>
    %19 = tpu.matmul %16, %18, %cst_13 {dimension_numbers = #tpu.dot_dimension_numbers<[1], [0], [0], [1], [0, 0, 1, 1], [], []>} : vector<16x128xf32>, vector<128x128xf32>, vector<16x128xf32> -> vector<16x128xf32>
    %20 = arith.addf %17, %19 : vector<16x128xf32>
    %c0_14 = arith.constant 0 : index
    %c0_15 = arith.constant 0 : index
    %21 = vector.load %arg8[%c0_14, %c0_15] : memref<16x128xf32, #tpu.memory_space<vmem>>, vector<16x128xf32>
    tpu.vector_store %arg8[%c0_14, %c0_15], %20 {strides = array<i32>} : memref<16x128xf32, #tpu.memory_space<vmem>>, vector<16x128xf32>,
    %c0_i32_16 = arith.constant 0 : i32
    %22 = arith.cmpi eq, %arg1, %c0_i32_16 : i32
    %23 = arith.extui %22 : i1 to i32
    %c0_i32_17 = arith.constant 0 : i32
    %24 = arith.cmpi ne, %23, %c0_i32_17 : i32
    scf.if %24 {
      %c0_18 = arith.constant 0 : index
      %c0_19 = arith.constant 0 : index
      %25 = vector.load %arg8[%c0_18, %c0_19] : memref<16x128xf32, #tpu.memory_space<vmem>>, vector<16x128xf32>
      %c0_20 = arith.constant 0 : index
      %c0_21 = arith.constant 0 : index
      %26 = vector.load %arg6[%c0_20, %c0_21] : memref<1x128xf32, #tpu.memory_space<vmem>>, vector<1x128xf32>
      %27 = vector.broadcast %26 : vector<1x128xf32> to vector<16x128xf32>
      %28 = arith.addf %25, %27 : vector<16x128xf32>
      %c0_22 = arith.constant 0 : index
      %c0_23 = arith.constant 0 : index
      %29 = vector.load %arg7[%c0_22, %c0_23] : memref<16x128xf32, #tpu.memory_space<vmem>>, vector<16x128xf32>
      tpu.vector_store %arg7[%c0_22, %c0_23], %28 {strides = array<i32>} : memref<16x128xf32, #tpu.memory_space<vmem>>, vector<16x128xf32>,
    } else {
    }
    return
  }
  func.func @transform_0(%arg0: i32, %arg1: i32) -> (i32, i32) {
    %c0_i32 = arith.constant 0 : i32
    %c0_i32_0 = arith.constant 0 : i32
    return %arg0, %c0_i32 : i32, i32
  }
  func.func @transform_1(%arg0: i32, %arg1: i32) -> (i32, i32) {
    %c0_i32 = arith.constant 0 : i32
    %c0_i32_0 = arith.constant 0 : i32
    return %c0_i32, %arg1 : i32, i32
  }
  func.func @transform_2(%arg0: i32, %arg1: i32) -> (i32, i32) {
    %c0_i32 = arith.constant 0 : i32
    %c0_i32_0 = arith.constant 0 : i32
    return %c0_i32, %arg1 : i32, i32
  }
  func.func @transform_3(%arg0: i32, %arg1: i32) -> (i32, i32) {
    %c0_i32 = arith.constant 0 : i32
    %c0_i32_0 = arith.constant 0 : i32
    return %arg1, %c0_i32 : i32, i32
  }
  func.func @transform_4(%arg0: i32, %arg1: i32) -> (i32, i32) {
    %c0_i32 = arith.constant 0 : i32
    %c0_i32_0 = arith.constant 0 : i32
    %c0_i32_1 = arith.constant 0 : i32
    return %c0_i32, %c0_i32_0 : i32, i32
  }
  func.func @transform_5(%arg0: i32, %arg1: i32) -> (i32, i32) {
    %c0_i32 = arith.constant 0 : i32
    %c0_i32_0 = arith.constant 0 : i32
    return %arg0, %c0_i32 : i32, i32
  }
}

</mosaic_0001>

<llo_original>
// kernel: tpu_custom_call.1
$region0: #{tpu_custom_call.1}
  #allocation0 [shape = 'u32[]', space=smem, size = 0x4, offset = 0x4, fixed_abs, tag = 'smem constant byte address 0x4 - core index']
  #allocation1 [shape = 'u32[144,128]{1,0:T(1,128)}', space=vmem, size = 0x12000, scoped, tag = 'internal scratch']
  #allocation2 [shape = 'f32[16,128]{1,0:T(8,128)}', space=vmem, size = 0x2000, scoped, tag = 'scratch operand']
  %s0 = inlined_call_operand.hbm [shape: f32[16,128], index: 0, kind: input, shape index: {}]
  %s1 = inlined_call_operand.hbm [shape: f32[128,128], index: 1, kind: input, shape index: {}]
  %s2 = inlined_call_operand.vmem [shape: f32[1,128], index: 2, kind: input, shape index: {}]
  %s3 = inlined_call_operand.hbm [shape: f32[128,128], index: 3, kind: input, shape index: {}]
  %s4 = inlined_call_operand.vmem [shape: f32[1,128], index: 4, kind: input, shape index: {}]
  %s5 = inlined_call_operand.hbm [shape: f32[16,128], index: 5, kind: output, shape index: {}]
  %s6 = sld [smem:[#allocation0]]
  $region50: #{tpu_custom_call.1} parent=0
    _
  %s8 = ssub.s32 1, %s6
  %s9 = scalar_select 0, %s8, %s6
  $region1: #{tpu_custom_call.1} parent=0
    #allocation3 [shape = 'u8[8192]{0}', space=vmem, size = 0x2000, scoped, tag = 'input window, operand 0, single buffered']
    #allocation4 [shape = 's32[1]{0}', space=sflag, size = 0x4, scoped, tag = 'scoped memory for tpu_custom_call.1']
    #allocation5 [shape = 's32[1]{0}', space=sflag, size = 0x4, scoped, tag = 'scoped memory for tpu_custom_call.1']
    #allocation6 [shape = 'u8[65536]{0}', space=vmem, size = 0x10000, scoped, tag = 'input window, operand 1, single buffered']
    #allocation7 [shape = 's32[1]{0}', space=sflag, size = 0x4, scoped, tag = 'scoped memory for tpu_custom_call.1']
    #allocation8 [shape = 'u8[65536]{0}', space=vmem, size = 0x10000, scoped, tag = 'input window, operand 3, single buffered']
    #allocation9 [shape = 'u8[8192]{0}', space=vmem, size = 0x2000, scoped, tag = 'output window, operand 0, single buffered']
    %10 = vsyncpa [#allocation4], 0
    %11 = vsyncpa [#allocation7], 0
    %12 = vsyncpa [#allocation5], 0
    // Predicated region
    $region2: #{tpu_custom_call.1} parent=1 // pred_check
      _
    $region3: #{tpu_custom_call.1} parent=1 // pred_check_branch
      %14 = sbr.rel (0) target = $region5
    $region4: #{tpu_custom_call.1} parent=1 // pred_region
      %s16 = ssub.s32 256, 256
      %17 = vsyncadd [#allocation4], %s16
      %s18 = sshll.u32 [#allocation3], 4
      %s19 = int_to_ptr.vmem [resolvable:$true] %s18
      %24 = dma.hbm_to_vmem [thread:$0]  %s0, 256, %s19, [#allocation4], 128, 128, 8
    $region5: #{tpu_custom_call.1} parent=1 // pred_fallthru
      _
    // Predicated region
    $region6: #{tpu_custom_call.1} parent=1 // pred_check
      _
    $region7: #{tpu_custom_call.1} parent=1 // pred_check_branch
      %26 = sbr.rel (0) target = $region9
    $region8: #{tpu_custom_call.1} parent=1 // pred_region
      %s28 = ssub.s32 2048, 2048
      %29 = vsyncadd [#allocation7], %s28
      %s30 = sshll.u32 [#allocation6], 4
      %s31 = int_to_ptr.vmem [resolvable:$true] %s30
      %36 = dma.hbm_to_vmem [thread:$0]  %s1, 2048, %s31, [#allocation7], 128, 128, 8
    $region9: #{tpu_custom_call.1} parent=1 // pred_fallthru
      _
    // Predicated region
    $region10: #{tpu_custom_call.1} parent=1 // pred_check
      _
    $region11: #{tpu_custom_call.1} parent=1 // pred_check_branch
      %38 = sbr.rel (0) target = $region13
    $region12: #{tpu_custom_call.1} parent=1 // pred_region
      _
    $region13: #{tpu_custom_call.1} parent=1 // pred_fallthru
      _
    // Predicated region
    $region14: #{tpu_custom_call.1} parent=1 // pred_check
      _
    $region15: #{tpu_custom_call.1} parent=1 // pred_check_branch
      %40 = sbr.rel (0) target = $region17
    $region16: #{tpu_custom_call.1} parent=1 // pred_region
      %s42 = ssub.s32 2048, 2048
      %43 = vsyncadd [#allocation7], %s42
      %s44 = sshll.u32 [#allocation8], 4
      %s45 = int_to_ptr.vmem [resolvable:$true] %s44
      %50 = dma.hbm_to_vmem [thread:$0]  %s3, 2048, %s45, [#allocation7], 128, 128, 8
    $region17: #{tpu_custom_call.1} parent=1 // pred_fallthru
      _
    // Predicated region
    $region18: #{tpu_custom_call.1} parent=1 // pred_check
      _
    $region19: #{tpu_custom_call.1} parent=1 // pred_check_branch
      %52 = sbr.rel (0) target = $region21
    $region20: #{tpu_custom_call.1} parent=1 // pred_region
      _
    $region21: #{tpu_custom_call.1} parent=1 // pred_fallthru
      _
    // Predicated region
    $region22: #{tpu_custom_call.1} parent=1 // pred_check
      _
    $region23: #{tpu_custom_call.1} parent=1 // pred_check_branch
      %54 = sbr.rel (0) target = $region25
    $region24: #{tpu_custom_call.1} parent=1 // pred_region
      %55 = dma.done [#allocation4], 256
    $region25: #{tpu_custom_call.1} parent=1 // pred_fallthru
      _
    // Predicated region
    $region26: #{tpu_custom_call.1} parent=1 // pred_check
      _
    $region27: #{tpu_custom_call.1} parent=1 // pred_check_branch
      %57 = sbr.rel (0) target = $region29
    $region28: #{tpu_custom_call.1} parent=1 // pred_region
      %58 = dma.done [#allocation7], 2048
    $region29: #{tpu_custom_call.1} parent=1 // pred_fallthru
      _
    // Predicated region
    $region30: #{tpu_custom_call.1} parent=1 // pred_check
      _
    $region31: #{tpu_custom_call.1} parent=1 // pred_check_branch
      %60 = sbr.rel (0) target = $region33
    $region32: #{tpu_custom_call.1} parent=1 // pred_region
      %61 = dma.done [#allocation7], 2048
    $region33: #{tpu_custom_call.1} parent=1 // pred_fallthru
      _
    %p62 = scmp.eq.s32.totalorder 0, 0
    // Predicated region
    $region34: #{tpu_custom_call.1} parent=1 // pred_check
      %p63 = pneg %p62
    $region35: #{tpu_custom_call.1} parent=1 // pred_check_branch
      %65 = sbr.rel (%p63) target = $region37
    $region36: #{tpu_custom_call.1} parent=1 // pred_region
      %66 = vst [vmem:[#allocation2] sm:$0xff] 0.0
      %67 = vst [vmem:[#allocation2 + $0x8] sm:$0xff] 0.0
    $region37: #{tpu_custom_call.1} parent=1 // pred_fallthru
      _
    %v68 = vld [vmem:[#allocation3] sm:$0xff]
    %v69 = vld [vmem:[#allocation3 + $0x8] sm:$0xff]
    %v70 = vld [vmem:[#allocation6] sm:$0xff]
    %v71 = vld [vmem:[#allocation6 + $0x8] sm:$0xff]
    %v72 = vld [vmem:[#allocation6 + $0x10] sm:$0xff]
    %v73 = vld [vmem:[#allocation6 + $0x18] sm:$0xff]
    %v74 = vld [vmem:[#allocation6 + $0x20] sm:$0xff]
    %v75 = vld [vmem:[#allocation6 + $0x28] sm:$0xff]
    %v76 = vld [vmem:[#allocation6 + $0x30] sm:$0xff]
    %v77 = vld [vmem:[#allocation6 + $0x38] sm:$0xff]
    %v78 = vld [vmem:[#allocation6 + $0x40] sm:$0xff]
    %v79 = vld [vmem:[#allocation6 + $0x48] sm:$0xff]
    %v80 = vld [vmem:[#allocation6 + $0x50] sm:$0xff]
    %v81 = vld [vmem:[#allocation6 + $0x58] sm:$0xff]
    %v82 = vld [vmem:[#allocation6 + $0x60] sm:$0xff]
    %v83 = vld [vmem:[#allocation6 + $0x68] sm:$0xff]
    %v84 = vld [vmem:[#allocation6 + $0x70] sm:$0xff]
    %v85 = vld [vmem:[#allocation6 + $0x78] sm:$0xff]
    %v86 = vld [vmem:[%s2] sm:$0x1]
    %v88 = vlaneseq
    %v89 = vshrl.u32 %v88, 7
    %v90 = vsub.s32 0, %v89
    %v91 = vrot.slane %v86, %v90
    %93 = vmatprep.subr.mxu0 0.0
    %94 = vmatpush1.msra.mxu0 %v85
    %95 = vmatprep.subr.mxu0 0.0
    %96 = vmatpush1.msra.mxu0 %v84
    %97 = vmatprep.subr.mxu0 0.0
    %98 = vmatpush1.msra.mxu0 %v83
    %99 = vmatprep.subr.mxu0 0.0
    %100 = vmatpush1.msra.mxu0 %v82
    %101 = vmatprep.subr.mxu0 0.0
    %102 = vmatpush1.msra.mxu0 %v81
    %103 = vmatprep.subr.mxu0 0.0
    %104 = vmatpush1.msra.mxu0 %v80
    %105 = vmatprep.subr.mxu0 0.0
    %106 = vmatpush1.msra.mxu0 %v79
    %107 = vmatprep.subr.mxu0 0.0
    %108 = vmatpush1.msra.mxu0 %v78
    %109 = vmatprep.subr.mxu0 0.0
    %110 = vmatpush1.msra.mxu0 %v77
    %111 = vmatprep.subr.mxu0 0.0
    %112 = vmatpush1.msra.mxu0 %v76
    %113 = vmatprep.subr.mxu0 0.0
    %114 = vmatpush1.msra.mxu0 %v75
    %115 = vmatprep.subr.mxu0 0.0
    %116 = vmatpush1.msra.mxu0 %v74
    %117 = vmatprep.subr.mxu0 0.0
    %118 = vmatpush1.msra.mxu0 %v73
    %119 = vmatprep.subr.mxu0 0.0
    %120 = vmatpush1.msra.mxu0 %v72
    %121 = vmatprep.subr.mxu0 0.0
    %122 = vmatpush1.msra.mxu0 %v71
    %123 = vmatprep.subr.mxu0 0.0
    %124 = vmatpush1.msra.mxu0 %v70
    %125 = vmatprep.subr.mxu0 0.0
    %126 = vmatpush2.msra.mxu0 0.0
    %127 = vmatprep.subr.mxu0 0.0
    %128 = vmatpush2.msra.mxu0 0.0
    %129 = vmatprep.subr.mxu0 0.0
    %130 = vmatpush2.msra.mxu0 0.0
    %131 = vmatprep.subr.mxu0 0.0
    %132 = vmatpush2.msra.mxu0 0.0
    %133 = vmatprep.subr.mxu0 0.0
    %134 = vmatpush2.msra.mxu0 0.0
    %135 = vmatprep.subr.mxu0 0.0
    %136 = vmatpush2.msra.mxu0 0.0
    %137 = vmatprep.subr.mxu0 0.0
    %138 = vmatpush2.msra.mxu0 0.0
    %139 = vmatprep.subr.mxu0 0.0
    %140 = vmatpush2.msra.mxu0 0.0
    %141 = vmatprep.subr.mxu0 0.0
    %142 = vmatpush2.msra.mxu0 0.0
    %143 = vmatprep.subr.mxu0 0.0
    %144 = vmatpush2.msra.mxu0 0.0
    %145 = vmatprep.subr.mxu0 0.0
    %146 = vmatpush2.msra.mxu0 0.0
    %147 = vmatprep.subr.mxu0 0.0
    %148 = vmatpush2.msra.mxu0 0.0
    %149 = vmatprep.subr.mxu0 0.0
    %150 = vmatpush2.msra.mxu0 0.0
    %151 = vmatprep.subr.mxu0 0.0
    %152 = vmatpush2.msra.mxu0 0.0
    %153 = vmatprep.subr.mxu0 0.0
    %154 = vmatpush2.msra.mxu0 0.0
    %155 = vmatprep.subr.mxu0 0.0
    %156 = vmatpush2.msra.mxu0 0.0
    %157 = vmatprep.mubr.f32.mxu0 0.0
    %158 = vmatmul.mubr.f32.gmra.mxu0 %v68
    %v159 = vpop.f32.mrf.mxu0
    %v160 = vadd.f32 %v91, %v159
    %v161 = vpop.f32.mrf.mxu0
    %162 = vmatprep.mubr.f32.mxu0 0.0
    %163 = vmatmul.mubr.f32.gmra.mxu0 %v69
    %v164 = vpop.f32.mrf.mxu0
    %v165 = vadd.f32 %v91, %v164
    %v166 = vpop.f32.mrf.mxu0
    %167 = vdwg.mxu0
    %v168 = vmul.f32 %v160, 0.5
    %v169 = vmul.f32 %v165, 0.5
    %v170 = vmul.f32 %v160, 0.70710677
    %v171 = vmul.f32 %v165, 0.70710677
    %v172 = verf.f32.pop %v170
    %v173 = verf.f32.pop %v171
    %v174 = vadd.f32 %v172, 1.0
    %v175 = vadd.f32 %v173, 1.0
    %v176 = vmul.f32 %v168, %v174
    %v177 = vmul.f32 %v169, %v175
    %v178 = vld [vmem:[#allocation2] sm:$0xff]
    %v179 = vld [vmem:[#allocation2 + $0x8] sm:$0xff]
    %v180 = vld [vmem:[#allocation8] sm:$0xff]
    %v181 = vld [vmem:[#allocation8 + $0x8] sm:$0xff]
    %v182 = vld [vmem:[#allocation8 + $0x10] sm:$0xff]
    %v183 = vld [vmem:[#allocation8 + $0x18] sm:$0xff]
    %v184 = vld [vmem:[#allocation8 + $0x20] sm:$0xff]
    %v185 = vld [vmem:[#allocation8 + $0x28] sm:$0xff]
    %v186 = vld [vmem:[#allocation8 + $0x30] sm:$0xff]
    %v187 = vld [vmem:[#allocation8 + $0x38] sm:$0xff]
    %v188 = vld [vmem:[#allocation8 + $0x40] sm:$0xff]
    %v189 = vld [vmem:[#allocation8 + $0x48] sm:$0xff]
    %v190 = vld [vmem:[#allocation8 + $0x50] sm:$0xff]
    %v191 = vld [vmem:[#allocation8 + $0x58] sm:$0xff]
    %v192 = vld [vmem:[#allocation8 + $0x60] sm:$0xff]
    %v193 = vld [vmem:[#allocation8 + $0x68] sm:$0xff]
    %v194 = vld [vmem:[#allocation8 + $0x70] sm:$0xff]
    %v195 = vld [vmem:[#allocation8 + $0x78] sm:$0xff]
    %196 = vmatprep.subr.mxu0 0.0
    %197 = vmatpush1.msra.mxu0 %v195
    %198 = vmatprep.subr.mxu0 0.0
    %199 = vmatpush1.msra.mxu0 %v194
    %200 = vmatprep.subr.mxu0 0.0
    %201 = vmatpush1.msra.mxu0 %v193
    %202 = vmatprep.subr.mxu0 0.0
    %203 = vmatpush1.msra.mxu0 %v192
    %204 = vmatprep.subr.mxu0 0.0
    %205 = vmatpush1.msra.mxu0 %v191
    %206 = vmatprep.subr.mxu0 0.0
    %207 = vmatpush1.msra.mxu0 %v190
    %208 = vmatprep.subr.mxu0 0.0
    %209 = vmatpush1.msra.mxu0 %v189
    %210 = vmatprep.subr.mxu0 0.0
    %211 = vmatpush1.msra.mxu0 %v188
    %212 = vmatprep.subr.mxu0 0.0
    %213 = vmatpush1.msra.mxu0 %v187
    %214 = vmatprep.subr.mxu0 0.0
    %215 = vmatpush1.msra.mxu0 %v186
    %216 = vmatprep.subr.mxu0 0.0
    %217 = vmatpush1.msra.mxu0 %v185
    %218 = vmatprep.subr.mxu0 0.0
    %219 = vmatpush1.msra.mxu0 %v184
    %220 = vmatprep.subr.mxu0 0.0
    %221 = vmatpush1.msra.mxu0 %v183
    %222 = vmatprep.subr.mxu0 0.0
    %223 = vmatpush1.msra.mxu0 %v182
    %224 = vmatprep.subr.mxu0 0.0
    %225 = vmatpush1.msra.mxu0 %v181
    %226 = vmatprep.subr.mxu0 0.0
    %227 = vmatpush1.msra.mxu0 %v180
    %228 = vmatprep.subr.mxu0 0.0
    %229 = vmatpush2.msra.mxu0 0.0
    %230 = vmatprep.subr.mxu0 0.0
    %231 = vmatpush2.msra.mxu0 0.0
    %232 = vmatprep.subr.mxu0 0.0
    %233 = vmatpush2.msra.mxu0 0.0
    %234 = vmatprep.subr.mxu0 0.0
    %235 = vmatpush2.msra.mxu0 0.0
    %236 = vmatprep.subr.mxu0 0.0
    %237 = vmatpush2.msra.mxu0 0.0
    %238 = vmatprep.subr.mxu0 0.0
    %239 = vmatpush2.msra.mxu0 0.0
    %240 = vmatprep.subr.mxu0 0.0
    %241 = vmatpush2.msra.mxu0 0.0
    %242 = vmatprep.subr.mxu0 0.0
    %243 = vmatpush2.msra.mxu0 0.0
    %244 = vmatprep.subr.mxu0 0.0
    %245 = vmatpush2.msra.mxu0 0.0
    %246 = vmatprep.subr.mxu0 0.0
    %247 = vmatpush2.msra.mxu0 0.0
    %248 = vmatprep.subr.mxu0 0.0
    %249 = vmatpush2.msra.mxu0 0.0
    %250 = vmatprep.subr.mxu0 0.0
    %251 = vmatpush2.msra.mxu0 0.0
    %252 = vmatprep.subr.mxu0 0.0
    %253 = vmatpush2.msra.mxu0 0.0
    %254 = vmatprep.subr.mxu0 0.0
    %255 = vmatpush2.msra.mxu0 0.0
    %256 = vmatprep.subr.mxu0 0.0
    %257 = vmatpush2.msra.mxu0 0.0
    %258 = vmatprep.subr.mxu0 0.0
    %259 = vmatpush2.msra.mxu0 0.0
    %260 = vmatprep.mubr.f32.mxu0 0.0
    %261 = vmatmul.mubr.f32.gmra.mxu0 %v176
    %v262 = vpop.f32.mrf.mxu0
    %v263 = vadd.f32 0.0, %v262
    %v264 = vpop.f32.mrf.mxu0
    %265 = vmatprep.mubr.f32.mxu0 0.0
    %266 = vmatmul.mubr.f32.gmra.mxu0 %v177
    %v267 = vpop.f32.mrf.mxu0
    %v268 = vadd.f32 0.0, %v267
    %v269 = vpop.f32.mrf.mxu0
    %270 = vdwg.mxu0
    %v271 = vadd.f32 %v178, %v263
    %v272 = vadd.f32 %v179, %v268
    %273 = vst [vmem:[#allocation2] sm:$0xff] %v271
    %274 = vst [vmem:[#allocation2 + $0x8] sm:$0xff] %v272
    // Predicated region
    $region38: #{tpu_custom_call.1} parent=1 // pred_check
      %p275 = pneg %p62
    $region39: #{tpu_custom_call.1} parent=1 // pred_check_branch
      %277 = sbr.rel (%p275) target = $region41
    $region40: #{tpu_custom_call.1} parent=1 // pred_region
      %v278 = vld [vmem:[#allocation2] sm:$0xff]
      %v279 = vld [vmem:[#allocation2 + $0x8] sm:$0xff]
      %v280 = vld [vmem:[%s4] sm:$0x1]
      %v282 = vlaneseq
      %v283 = vshrl.u32 %v282, 7
      %v284 = vsub.s32 0, %v283
      %v285 = vrot.slane %v280, %v284
      %v287 = vadd.f32 %v278, %v285
      %v288 = vadd.f32 %v279, %v285
      %289 = vst [vmem:[#allocation9] sm:$0xff] %v287
      %290 = vst [vmem:[#allocation9 + $0x8] sm:$0xff] %v288
    $region41: #{tpu_custom_call.1} parent=1 // pred_fallthru
      _
    // Predicated region
    $region42: #{tpu_custom_call.1} parent=1 // pred_check
      _
    $region43: #{tpu_custom_call.1} parent=1 // pred_check_branch
      %292 = sbr.rel (0) target = $region45
    $region44: #{tpu_custom_call.1} parent=1 // pred_region
      %s294 = ssub.s32 256, 256
      %295 = vsyncadd [#allocation5], %s294
      %s296 = sshll.u32 [#allocation9], 4
      %s297 = int_to_ptr.vmem [resolvable:$true] %s296
      %302 = dma.vmem_to_hbm [thread:$0]  %s297, 256, %s5, [#allocation5], 128, 128, 8
    $region45: #{tpu_custom_call.1} parent=1 // pred_fallthru
      _
    // Predicated region
    $region46: #{tpu_custom_call.1} parent=1 // pred_check
      _
    $region47: #{tpu_custom_call.1} parent=1 // pred_check_branch
      %304 = sbr.rel (0) target = $region49
    $region48: #{tpu_custom_call.1} parent=1 // pred_region
      %305 = dma.done [#allocation5], 256
    $region49: #{tpu_custom_call.1} parent=1 // pred_fallthru
      _
    %306 = vsyncpa [#allocation4], 1
    %307 = vsyncpa [#allocation7], 1
    %308 = vsyncpa [#allocation5], 1

</llo_original>
